<compile_context>
chip_gen: v5e
topology: v5e:2x2
jax: 0.10.0
libtpu: 0.0.40
codegen_flags: <defaults>
</compile_context>

<pallas_src>
import functools

import jax
import jax.numpy as jnp
from jax.experimental import pallas as pl
from jax.experimental.pallas import tpu as pltpu

C_IN = 96
C_OUT = 384
EPS = 1e-5


def _ln_linear_kernel(x_ref, w_ref, b_ref, o_ref):
    # x_ref: (tm, C_IN) in input dtype
    # w_ref: (C_IN, C_OUT), gamma already folded in, bf16
    # b_ref: (1, C_OUT), beta already folded in, f32
    x = x_ref[...].astype(jnp.float32)

    # One-pass LayerNorm statistics over the feature axis (f32).
    s = jnp.sum(x, axis=-1, keepdims=True)
    s2 = jnp.sum(x * x, axis=-1, keepdims=True)
    mean = s * (1.0 / C_IN)
    var = s2 * (1.0 / C_IN) - mean * mean
    inv = jax.lax.rsqrt(var + EPS)
    xn = ((x - mean) * inv).astype(w_ref.dtype)

    # Matmul on bf16 operands with f32 accumulation (affine already folded
    # into w_ref / b_ref by the wrapper).
    out = jnp.dot(xn, w_ref[...], preferred_element_type=jnp.float32)
    out = out + b_ref[...]
    o_ref[...] = out.astype(o_ref.dtype)


def _choose_tm(rows, target_steps=8):
    """Row tile: multiple of 8 that divides rows, targeting >= target_steps
    grid steps. Falls back to a single full-size tile if rows % 8 != 0."""
    if rows % 8 != 0:
        return rows  # single block equal to the full array dim (always legal)
    best = None
    for d in range(8, rows + 1, 8):
        if rows % d == 0 and rows // d >= target_steps:
            best = d
    if best is None:
        # No divisor deep enough; take the smallest multiple-of-8 divisor
        # (deepest grid available), or the whole thing if none.
        for d in range(8, rows + 1, 8):
            if rows % d == 0:
                return d
        return rows
    return best


@functools.partial(jax.jit, static_argnames=("tm", "matmul_dtype", "out_dtype"))
def layernorm_linear(x, gamma, beta, w, b, *, tm=None,
                     matmul_dtype=jnp.bfloat16, out_dtype=None):
    """x: [N, H, W, C_IN] -> [N, H, W, C_OUT] == Linear(LayerNorm(x))."""
    n, h, wdim, c = x.shape
    assert c == C_IN
    rows = n * h * wdim
    if out_dtype is None:
        out_dtype = x.dtype
    if tm is None:
        tm = _choose_tm(rows)
    assert rows % tm == 0, f"tm={tm} must divide rows={rows}"

    # Fold LayerNorm affine into the matmul parameters (once, in f32).
    w32 = w.astype(jnp.float32)
    w_fold = (gamma.astype(jnp.float32)[:, None] * w32).astype(matmul_dtype)
    b_fold = (beta.astype(jnp.float32) @ w32
              + b.astype(jnp.float32)).reshape(1, C_OUT)

    x2 = x.reshape(rows, C_IN)
    grid = (rows // tm,)

    bytes_accessed = (x2.size * x2.dtype.itemsize
                      + w_fold.size * w_fold.dtype.itemsize
                      + b_fold.size * b_fold.dtype.itemsize
                      + rows * C_OUT * jnp.dtype(out_dtype).itemsize)

    out = pl.pallas_call(
        _ln_linear_kernel,
        out_shape=jax.ShapeDtypeStruct((rows, C_OUT), out_dtype),
        grid_spec=pltpu.PrefetchScalarGridSpec(
            num_scalar_prefetch=0,
            grid=grid,
            in_specs=[
                pl.BlockSpec((tm, C_IN), lambda i: (i, 0)),
                pl.BlockSpec((C_IN, C_OUT), lambda i: (0, 0)),
                pl.BlockSpec((1, C_OUT), lambda i: (0, 0)),
            ],
            out_specs=pl.BlockSpec((tm, C_OUT), lambda i: (i, 0)),
        ),
        compiler_params=pltpu.CompilerParams(
            dimension_semantics=("parallel",)),
        cost_estimate=pl.CostEstimate(
            flops=2 * rows * C_IN * C_OUT,
            transcendentals=rows,
            bytes_accessed=bytes_accessed),
    )(x2, w_fold, b_fold)

    return out.reshape(n, h, wdim, C_OUT)


def _reference(x, gamma, beta, w, b):
    x = x.astype(jnp.float32)
    mean = jnp.mean(x, axis=-1, keepdims=True)
    var = jnp.mean((x - mean) ** 2, axis=-1, keepdims=True)
    y = (x - mean) * jax.lax.rsqrt(var + EPS) * gamma + beta
    return jnp.einsum("nhwc,cd->nhwd", y, w) + b


if __name__ == "__main__":
    key = jax.random.PRNGKey(0)
    kx, kg, kb, kw, kbi = jax.random.split(key, 5)

    # Small spatial shape; channel dims fixed by the module (96 -> 384).
    x = jax.random.normal(kx, (1, 8, 8, C_IN), dtype=jnp.float32)

    gamma = 1.0 + 0.01 * jax.random.normal(kg, (C_IN,), dtype=jnp.float32)
    beta = 0.01 * jax.random.normal(kb, (C_IN,), dtype=jnp.float32)
    w = 0.05 * jax.random.normal(kw, (C_IN, C_OUT), dtype=jnp.float32)
    b = 0.01 * jax.random.normal(kbi, (C_OUT,), dtype=jnp.float32)

    ref = _reference(x, gamma, beta, w, b)

    # Default tile selection (64 rows -> tm=8, grid=(8,)): exercises the
    # deep-pipeline path.
    out = jax.block_until_ready(layernorm_linear(x, gamma, beta, w, b))
    assert out.shape == (1, 8, 8, C_OUT)
    # bf16 matmul operands with f32 accumulation -> ~1e-2-scale tolerance.
    assert jnp.allclose(out, ref, atol=3e-2, rtol=3e-2)

    # Explicit tile that divides rows (64 rows, tm=32 -> grid=(2,)).
    out2 = jax.block_until_ready(layernorm_linear(x, gamma, beta, w, b, tm=32))
    assert out2.shape == (1, 8, 8, C_OUT)
    assert jnp.allclose(out2, ref, atol=3e-2, rtol=3e-2)

    # Optional bf16 output path (for downstream consumers that take bf16).
    out3 = jax.block_until_ready(
        layernorm_linear(x, gamma, beta, w, b, out_dtype=jnp.bfloat16))
    assert out3.dtype == jnp.bfloat16
    assert jnp.allclose(out3.astype(jnp.float32), ref, atol=6e-2, rtol=6e-2)

    print("KERNEL_OK")
</pallas_src>

<mosaic_0001>
module attributes {stable_mosaic.version = 11 : i64} {
  func.func @_ln_linear_kernel(%arg0: i32, %arg1: memref<8x96xf32, #tpu.memory_space<vmem>>, %arg2: memref<96x384xbf16, #tpu.memory_space<vmem>>, %arg3: memref<1x384xf32, #tpu.memory_space<vmem>>, %arg4: memref<8x384xf32, #tpu.memory_space<vmem>>) attributes {dimension_semantics = [#tpu.dimension_semantics<parallel>], iteration_bounds = array<i64: 8>, scalar_prefetch = 0 : i64, scratch_operands = 0 : i64, tpu.core_type = #tpu.core_type<tc>, window_params = [{transform_indices = @transform_0, window_bounds = array<i64: 8, 96>}, {pipeline_mode = #tpu.pipeline_mode<synchronous>, transform_indices = @transform_1, window_bounds = array<i64: 96, 384>}, {pipeline_mode = #tpu.pipeline_mode<synchronous>, transform_indices = @transform_2, window_bounds = array<i64: 1, 384>}, {transform_indices = @transform_3, window_bounds = array<i64: 8, 384>}]} {
    %c0 = arith.constant 0 : index
    %c0_0 = arith.constant 0 : index
    %0 = vector.load %arg1[%c0, %c0_0] : memref<8x96xf32, #tpu.memory_space<vmem>>, vector<8x96xf32>
    %cst = arith.constant dense<0.000000e+00> : vector<8xf32>
    %1 = vector.multi_reduction <add>, %0, %cst [1] : vector<8x96xf32> to vector<8xf32>
    %2 = vector.shape_cast %1 : vector<8xf32> to vector<8x1xf32>
    %3 = arith.mulf %0, %0 : vector<8x96xf32>
    %cst_1 = arith.constant dense<0.000000e+00> : vector<8xf32>
    %4 = vector.multi_reduction <add>, %3, %cst_1 [1] : vector<8x96xf32> to vector<8xf32>
    %5 = vector.shape_cast %4 : vector<8xf32> to vector<8x1xf32>
    %cst_2 = arith.constant 0.010416667 : f32
    %6 = vector.broadcast %cst_2 : f32 to vector<8x1xf32>
    %7 = arith.mulf %2, %6 : vector<8x1xf32>
    %cst_3 = arith.constant 0.010416667 : f32
    %8 = vector.broadcast %cst_3 : f32 to vector<8x1xf32>
    %9 = arith.mulf %5, %8 : vector<8x1xf32>
    %10 = arith.mulf %7, %7 : vector<8x1xf32>
    %11 = arith.subf %9, %10 : vector<8x1xf32>
    %cst_4 = arith.constant 9.99999974E-6 : f32
    %12 = vector.broadcast %cst_4 : f32 to vector<8x1xf32>
    %13 = arith.addf %11, %12 : vector<8x1xf32>
    %14 = math.rsqrt %13 : vector<8x1xf32>
    %15 = vector.broadcast %7 : vector<8x1xf32> to vector<8x96xf32>
    %16 = arith.subf %0, %15 : vector<8x96xf32>
    %17 = vector.broadcast %14 : vector<8x1xf32> to vector<8x96xf32>
    %18 = arith.mulf %16, %17 : vector<8x96xf32>
    %19 = arith.truncf %18 : vector<8x96xf32> to vector<8x96xbf16>
    %c0_5 = arith.constant 0 : index
    %c0_6 = arith.constant 0 : index
    %20 = vector.load %arg2[%c0_5, %c0_6] : memref<96x384xbf16, #tpu.memory_space<vmem>>, vector<96x384xbf16>
    %cst_7 = arith.constant dense<0.000000e+00> : vector<8x384xf32>
    %21 = tpu.matmul %19, %20, %cst_7 {dimension_numbers = #tpu.dot_dimension_numbers<[1], [0], [0], [1], [0, 0, 1, 1], [], []>} : vector<8x96xbf16>, vector<96x384xbf16>, vector<8x384xf32> -> vector<8x384xf32>
    %c0_8 = arith.constant 0 : index
    %c0_9 = arith.constant 0 : index
    %22 = vector.load %arg3[%c0_8, %c0_9] : memref<1x384xf32, #tpu.memory_space<vmem>>, vector<1x384xf32>
    %23 = vector.broadcast %22 : vector<1x384xf32> to vector<8x384xf32>
    %24 = arith.addf %21, %23 : vector<8x384xf32>
    %c0_10 = arith.constant 0 : index
    %c0_11 = arith.constant 0 : index
    %25 = vector.load %arg4[%c0_10, %c0_11] : memref<8x384xf32, #tpu.memory_space<vmem>>, vector<8x384xf32>
    tpu.vector_store %arg4[%c0_10, %c0_11], %24 {strides = array<i32>} : memref<8x384xf32, #tpu.memory_space<vmem>>, vector<8x384xf32>,
    return
  }
  func.func @transform_0(%arg0: i32) -> (i32, i32) {
    %c0_i32 = arith.constant 0 : i32
    %c0_i32_0 = arith.constant 0 : i32
    return %arg0, %c0_i32 : i32, i32
  }
  func.func @transform_1(%arg0: i32) -> (i32, i32) {
    %c0_i32 = arith.constant 0 : i32
    %c0_i32_0 = arith.constant 0 : i32
    %c0_i32_1 = arith.constant 0 : i32
    return %c0_i32, %c0_i32_0 : i32, i32
  }
  func.func @transform_2(%arg0: i32) -> (i32, i32) {
    %c0_i32 = arith.constant 0 : i32
    %c0_i32_0 = arith.constant 0 : i32
    %c0_i32_1 = arith.constant 0 : i32
    return %c0_i32, %c0_i32_0 : i32, i32
  }
  func.func @transform_3(%arg0: i32) -> (i32, i32) {
    %c0_i32 = arith.constant 0 : i32
    %c0_i32_0 = arith.constant 0 : i32
    return %arg0, %c0_i32 : i32, i32
  }
}

</mosaic_0001>

<llo_original>
// kernel: layernorm_linear.1
$region0: #{layernorm_linear.1}
  #allocation0 [shape = 'u32[]', space=smem, size = 0x4, offset = 0x4, fixed_abs, tag = 'smem constant byte address 0x4 - core index']
  #allocation1 [shape = 'u32[72,128]{1,0:T(1,128)}', space=vmem, size = 0x9000, scoped, tag = 'internal scratch']
  %s0 = inlined_call_operand.vmem [shape: f32[64,96], index: 0, kind: input, shape index: {}]
  %s1 = inlined_call_operand.vmem [shape: bf16[96,384], index: 1, kind: input, shape index: {}]
  %s2 = inlined_call_operand.vmem [shape: f32[1,384], index: 2, kind: input, shape index: {}]
  %s3 = inlined_call_operand.hbm [shape: f32[64,384], index: 3, kind: output, shape index: {}]
  %s4 = sld [smem:[#allocation0]]
  $region45: #{layernorm_linear.1} parent=0
    _
  %s6 = ssub.s32 1, %s4
  %s7 = scalar_select 0, %s6, %s4
  $region1: #{layernorm_linear.1} parent=0
    #allocation2 [shape = 'u8[24576]{0}', space=vmem, size = 0x6000, scoped, tag = 'output window, operand 0']
    #allocation3 [shape = 's32[2]{0}', space=sflag, size = 0x8, scoped, tag = 'scoped memory for layernorm_linear.1']
    %8 = vsyncpa [#allocation3], 0
    %s9 = scalar_lea.sflag [#allocation3], 1
    %10 = vsyncpa %s9, 0
    loop: start=0, step=1, limit=10
    $region2: #{layernorm_linear.1} parent=1 // loop_pre_header
      _
    $region3: #{layernorm_linear.1} parent=1 // loop_header
      %s12 = sphi 0, %s16
      %p13 = scmp.ge.s32.totalorder %s12, 10
      %s22 = sphi 0, %s24
      %s25 = sphi 0, %s22
      %s26 = sphi 0, %s25
      %s42 = sphi 0, %s26
      %s46 = sphi 0, %s46
      %s48 = sphi 0, %s46
      %s49 = sphi 0, %s48
      %s63 = sphi 0, %s49
      %s67 = sphi 0, %s67
      %s69 = sphi 0, %s67
      %s70 = sphi 0, %s69
      %s84 = sphi 0, %s70
      %s90 = sphi 0, %s92
      %s93 = sphi 0, %s90
      %s94 = sphi 0, %s93
      %s110 = sphi 0, %s94
    $region4: #{layernorm_linear.1} parent=1 // loop_header_branch
      %15 = sbr.rel (%p13) target = $region8
    $region5: #{layernorm_linear.1} parent=1 // loop_body
      %s17 = ssub.s32 %s12, 1
      %s18 = ssub.s32 %s12, 2
      %s19 = sadd.s32 %s12, 1
      %s20 = ssub.s32 %s12, %s19
      %p21 = scmp.eq.s32.totalorder %s20, 0
      %s23 = sadd.s32 %s22, 1
      %s24 = scalar_select %p21, %s22, %s23
      %p27 = pneg %p21
      %p28 = scmp.eq.s32.totalorder %s12, 7
      %p29 = por %p27, %p28
      %p30 = scmp.ne.s32.totalorder %s22, %s25
      %p31 = scmp.eq.s32.totalorder %s12, 0
      %p32 = por %p30, %p31
      %p33 = scmp.ne.s32.totalorder %s22, %s25
      %p34 = scmp.eq.s32.totalorder %s17, 7
      %p35 = por %p33, %p34
      %p36 = scmp.ne.s32.totalorder %s25, %s26
      %p37 = scmp.eq.s32.totalorder %s17, 0
      %p38 = por %p36, %p37
      %p39 = scmp.ne.s32.totalorder %s25, %s26
      %p40 = scmp.eq.s32.totalorder %s18, 7
      %p41 = por %p39, %p40
      %p43 = scmp.ne.s32.totalorder %s26, %s42
      %p44 = scmp.eq.s32.totalorder %s18, 0
      %p45 = por %p43, %p44
      %s47 = sadd.s32 %s46, 1
      %p50 = scmp.eq.s32.totalorder %s12, 7
      %p51 = scmp.ne.s32.totalorder %s46, %s48
      %p52 = scmp.eq.s32.totalorder %s12, 0
      %p53 = por %p51, %p52
      %p54 = scmp.ne.s32.totalorder %s46, %s48
      %p55 = scmp.eq.s32.totalorder %s17, 7
      %p56 = por %p54, %p55
      %p57 = scmp.ne.s32.totalorder %s48, %s49
      %p58 = scmp.eq.s32.totalorder %s17, 0
      %p59 = por %p57, %p58
      %p60 = scmp.ne.s32.totalorder %s48, %s49
      %p61 = scmp.eq.s32.totalorder %s18, 7
      %p62 = por %p60, %p61
      %p64 = scmp.ne.s32.totalorder %s49, %s63
      %p65 = scmp.eq.s32.totalorder %s18, 0
      %p66 = por %p64, %p65
      %s68 = sadd.s32 %s67, 1
      %p71 = scmp.eq.s32.totalorder %s12, 7
      %p72 = scmp.ne.s32.totalorder %s67, %s69
      %p73 = scmp.eq.s32.totalorder %s12, 0
      %p74 = por %p72, %p73
      %p75 = scmp.ne.s32.totalorder %s67, %s69
      %p76 = scmp.eq.s32.totalorder %s17, 7
      %p77 = por %p75, %p76
      %p78 = scmp.ne.s32.totalorder %s69, %s70
      %p79 = scmp.eq.s32.totalorder %s17, 0
      %p80 = por %p78, %p79
      %p81 = scmp.ne.s32.totalorder %s69, %s70
      %p82 = scmp.eq.s32.totalorder %s18, 7
      %p83 = por %p81, %p82
      %p85 = scmp.ne.s32.totalorder %s70, %s84
      %p86 = scmp.eq.s32.totalorder %s18, 0
      %p87 = por %p85, %p86
      %s88 = ssub.s32 %s12, %s19
      %p89 = scmp.eq.s32.totalorder %s88, 0
      %s91 = sadd.s32 %s90, 1
      %s92 = scalar_select %p89, %s90, %s91
      %p95 = pneg %p89
      %p96 = scmp.eq.s32.totalorder %s12, 7
      %p97 = por %p95, %p96
      %p98 = scmp.ne.s32.totalorder %s90, %s93
      %p99 = scmp.eq.s32.totalorder %s12, 0
      %p100 = por %p98, %p99
      %p101 = scmp.ne.s32.totalorder %s90, %s93
      %p102 = scmp.eq.s32.totalorder %s17, 7
      %p103 = por %p101, %p102
      %p104 = scmp.ne.s32.totalorder %s93, %s94
      %p105 = scmp.eq.s32.totalorder %s17, 0
      %p106 = por %p104, %p105
      %p107 = scmp.ne.s32.totalorder %s93, %s94
      %p108 = scmp.eq.s32.totalorder %s18, 7
      %p109 = por %p107, %p108
      %p111 = scmp.ne.s32.totalorder %s94, %s110
      %p112 = scmp.eq.s32.totalorder %s18, 0
      %p113 = por %p111, %p112
      %p114 = scmp.le.s32.totalorder 1, %s12
      %p115 = scmp.lt.s32.totalorder %s12, 9
      %p116 = pnand %p114, %p115
      %p117 = pneg %p116
      // Predicated region
      $region9: #{layernorm_linear.1} parent=5 // pred_check
        _
      $region10: #{layernorm_linear.1} parent=5 // pred_check_branch
        %119 = sbr.rel (%p116) target = $region12
      $region11: #{layernorm_linear.1} parent=5 // pred_region
        %s120 = ssub.s32 %s12, 1
        // Predicated region
        $region13: #{layernorm_linear.1} parent=11 // pred_check
          %p121 = pneg %p59
        $region14: #{layernorm_linear.1} parent=11 // pred_check_branch
          %123 = sbr.rel (%p121) target = $region16
        $region15: #{layernorm_linear.1} parent=11 // pred_region
          _
        $region16: #{layernorm_linear.1} parent=11 // pred_fallthru
          _
        // Predicated region
        $region17: #{layernorm_linear.1} parent=11 // pred_check
          %p124 = pneg %p80
        $region18: #{layernorm_linear.1} parent=11 // pred_check_branch
          %126 = sbr.rel (%p124) target = $region20
        $region19: #{layernorm_linear.1} parent=11 // pred_region
          _
        $region20: #{layernorm_linear.1} parent=11 // pred_fallthru
          _
      $region12: #{layernorm_linear.1} parent=5 // pred_fallthru
        _
      %p127 = scmp.lt.s32.totalorder %s12, 8
      // Predicated region
      $region21: #{layernorm_linear.1} parent=5 // pred_check
        %p128 = pneg %p127
      $region22: #{layernorm_linear.1} parent=5 // pred_check_branch
        %130 = sbr.rel (%p128) target = $region24
      $region23: #{layernorm_linear.1} parent=5 // pred_region
        // Predicated region
        $region25: #{layernorm_linear.1} parent=23 // pred_check
          %p131 = pneg %p32
        $region26: #{layernorm_linear.1} parent=23 // pred_check_branch
          %133 = sbr.rel (%p131) target = $region28
        $region27: #{layernorm_linear.1} parent=23 // pred_region
          %p134 = scmp.lt.s32.totalorder %s12, 7
          %s135 = scalar_select %p134, %s12, 7
          %s136 = smul.addr %s135, 8
          %s137 = scalar_lea.vmem %s0, %s136
        $region28: #{layernorm_linear.1} parent=23 // pred_fallthru
          _
      $region24: #{layernorm_linear.1} parent=5 // pred_fallthru
        _
      %p138 = scmp.le.s32.totalorder 1, %s12
      %p139 = scmp.lt.s32.totalorder %s12, 9
      %p140 = pnand %p138, %p139
      %p141 = pneg %p140
      // Predicated region
      $region29: #{layernorm_linear.1} parent=5 // pred_check
        _
      $region30: #{layernorm_linear.1} parent=5 // pred_check_branch
        %143 = sbr.rel (%p140) target = $region32
      $region31: #{layernorm_linear.1} parent=5 // pred_region
        %s144 = ssub.s32 %s12, 1
        %p145 = scmp.lt.s32.totalorder %s17, 7
        %s146 = scalar_select %p145, %s17, 7
        %s147 = smul.addr %s146, 8
        %s148 = scalar_lea.vmem %s0, %s147
        %p149 = pneg %p38
        %p150 = pneg %p35
        %p151 = pneg %p59
        %p152 = pneg %p56
        %p153 = pneg %p80
        %p154 = pneg %p77
        %p155 = pneg %p106
        %p156 = pneg %p103
        %s157 = sand.u32 %s93, 1
        %s158 = scalar_lea.sflag [#allocation3], %s157
        %s159 = sand.u32 %s93, 1
        %s160 = smul.addr %s159, 24
        %s161 = scalar_lea.vmem [#allocation2], %s160
        %p162 = scmp.lt.s32.totalorder %s17, 7
        %s163 = scalar_select %p162, %s17, 7
        %s164 = smul.addr %s163, 8
        %s165 = scalar_lea.vmem %s0, %s164
        %v167 = vld [vmem:[%s165] sm:$0xff]
        %vm168 = vcmask 785408
        %v169 = vsel %vm168, %v167, 0.0
        %170 = vadd.xlane.f32.xlu0 %v169
        %v171 = vpop.xlane.xlu0 %170
        %v172 = vmul.f32 %v167, %v167
        %v173 = vsel %vm168, %v172, 0.0
        %174 = vadd.xlane.f32.xlu0 %v173
        %v175 = vpop.xlane.xlu0 %174
        %v176 = vmul.f32 %v171, 0.010416667
        %v177 = vmul.f32 %v175, 0.010416667
        %v178 = vmul.f32 %v176, %v176
        %v179 = vsub.f32 %v177, %v178
        %v180 = vadd.f32 %v179, 1e-05
        %v181 = vrsqrt.pop %v180
        %v182 = vmul.f32 %v181, %v180
        %v183 = vmul.f32 %v182, %v181
        %v184 = vmul.f32 0.5, %v183
        %v185 = vsub.f32 1.5, %v184
        %v186 = vmul.f32 %v181, %v185
        %vm187 = vweird.f32 %v180
        %vm188 = vweird.f32 %v181
        %vm189 = vmor %vm187, %vm188
        %v190 = vsel %vm189, %v181, %v186
        %v191 = vsub.f32 %v167, %v176
        %v192 = vmul.f32 %v191, %v190
        %v193 = vpack.c.bf16 %v192, %v192
        %v194 = vld [vmem:[%s1] sm:$0xff]
        %v195 = vld [vmem:[%s1 + $0x8] sm:$0xf]
        %v196 = vld [vmem:[%s1 + $0xc] sm:$0xff]
        %v197 = vld [vmem:[%s1 + $0x14] sm:$0xf]
        %v198 = vld [vmem:[%s1 + $0x18] sm:$0xff]
        %v199 = vld [vmem:[%s1 + $0x20] sm:$0xf]
        %v200 = vld [vmem:[%s1 + $0x24] sm:$0xff]
        %v201 = vld [vmem:[%s1 + $0x2c] sm:$0xf]
        %v202 = vld [vmem:[%s1 + $0x30] sm:$0xff]
        %v203 = vld [vmem:[%s1 + $0x38] sm:$0xf]
        %v204 = vld [vmem:[%s1 + $0x3c] sm:$0xff]
        %v205 = vld [vmem:[%s1 + $0x44] sm:$0xf]
        %v206 = vld [vmem:[%s1 + $0x48] sm:$0xff]
        %v207 = vld [vmem:[%s1 + $0x50] sm:$0xf]
        %v208 = vld [vmem:[%s1 + $0x54] sm:$0xff]
        %v209 = vld [vmem:[%s1 + $0x5c] sm:$0xf]
        %v210 = vld [vmem:[%s1 + $0x60] sm:$0xff]
        %v211 = vld [vmem:[%s1 + $0x68] sm:$0xf]
        %v212 = vld [vmem:[%s1 + $0x6c] sm:$0xff]
        %v213 = vld [vmem:[%s1 + $0x74] sm:$0xf]
        %v214 = vld [vmem:[%s1 + $0x78] sm:$0xff]
        %v215 = vld [vmem:[%s1 + $0x80] sm:$0xf]
        %v216 = vld [vmem:[%s1 + $0x84] sm:$0xff]
        %v217 = vld [vmem:[%s1 + $0x8c] sm:$0xf]
        %v218 = vld [vmem:[%s2] sm:$0x7]
        %v220 = vperm.slane %v218, 0
        %v221 = vperm.slane %v218, 1
        %v222 = vperm.slane %v218, 2
        %v250 = vunpack.c.l.b16 %v194
        %v251 = vunpack.c.h.b16 %v194
        %v252 = vunpack.c.l.b16 %v195
        %v253 = vunpack.c.l.b16 %v196
        %v254 = vunpack.c.h.b16 %v196
        %v255 = vunpack.c.l.b16 %v197
        %v256 = vunpack.c.l.b16 %v198
        %v257 = vunpack.c.h.b16 %v198
        %v258 = vunpack.c.l.b16 %v199
        %v259 = vunpack.c.l.b16 %v200
        %v260 = vunpack.c.h.b16 %v200
        %v261 = vunpack.c.l.b16 %v201
        %v262 = vunpack.c.l.b16 %v202
        %v263 = vunpack.c.h.b16 %v202
        %v264 = vunpack.c.l.b16 %v203
        %v265 = vunpack.c.l.b16 %v204
        %v266 = vunpack.c.h.b16 %v204
        %v267 = vunpack.c.l.b16 %v205
        %v268 = vunpack.c.l.b16 %v206
        %v269 = vunpack.c.h.b16 %v206
        %v270 = vunpack.c.l.b16 %v207
        %v271 = vunpack.c.l.b16 %v208
        %v272 = vunpack.c.h.b16 %v208
        %v273 = vunpack.c.l.b16 %v209
        %v274 = vunpack.c.l.b16 %v210
        %v275 = vunpack.c.h.b16 %v210
        %v276 = vunpack.c.l.b16 %v211
        %v277 = vunpack.c.l.b16 %v212
        %v278 = vunpack.c.h.b16 %v212
        %v279 = vunpack.c.l.b16 %v213
        %v280 = vunpack.c.l.b16 %v214
        %v281 = vunpack.c.h.b16 %v214
        %v282 = vunpack.c.l.b16 %v215
        %v283 = vunpack.c.l.b16 %v216
        %v284 = vunpack.c.h.b16 %v216
        %v285 = vunpack.c.l.b16 %v217
        %v286 = vpack.c.b16 %v253, %v250
        %v287 = vpack.c.b16 %v254, %v251
        %v288 = vpack.c.b16 %v255, %v252
        %v289 = vpack.c.b16 %v259, %v256
        %v290 = vpack.c.b16 %v260, %v257
        %v291 = vpack.c.b16 %v261, %v258
        %v292 = vpack.c.b16 %v265, %v262
        %v293 = vpack.c.b16 %v266, %v263
        %v294 = vpack.c.b16 %v267, %v264
        %v295 = vpack.c.b16 %v271, %v268
        %v296 = vpack.c.b16 %v272, %v269
        %v297 = vpack.c.b16 %v273, %v270
        %v298 = vpack.c.b16 %v277, %v274
        %v299 = vpack.c.b16 %v278, %v275
        %v300 = vpack.c.b16 %v279, %v276
        %v301 = vpack.c.b16 %v283, %v280
        %v302 = vpack.c.b16 %v284, %v281
        %v303 = vpack.c.b16 %v285, %v282
        %v323 = vsel %vm168, %v193, 0
        %325 = vmatpush.bf16.msra.mxu0 0
        %326 = vmatpush.bf16.msra.mxu0 0
        %327 = vmatpush.bf16.msra.mxu0 %v301
        %328 = vmatpush.bf16.msra.mxu0 %v298
        %329 = vmatpush.bf16.msra.mxu0 %v295
        %330 = vmatpush.bf16.msra.mxu0 %v292
        %331 = vmatpush.bf16.msra.mxu0 %v289
        %332 = vmatpush.bf16.msra.mxu0 %v286
        %333 = vmatmul.bf16.gmra.mxu0 %v323
        %v334 = vpop.f32.mrf.mxu0
        %v335 = vadd.f32 %v220, %v334
        %v336 = vpop.f32.mrf.mxu0
        %337 = vdwg.mxu0
        %338 = vmatpush.bf16.msra.mxu0 0
        %339 = vmatpush.bf16.msra.mxu0 0
        %340 = vmatpush.bf16.msra.mxu0 %v302
        %341 = vmatpush.bf16.msra.mxu0 %v299
        %342 = vmatpush.bf16.msra.mxu0 %v296
        %343 = vmatpush.bf16.msra.mxu0 %v293
        %344 = vmatpush.bf16.msra.mxu0 %v290
        %345 = vmatpush.bf16.msra.mxu0 %v287
        %346 = vmatmul.bf16.gmra.mxu0 %v323
        %v347 = vpop.f32.mrf.mxu0
        %v348 = vadd.f32 %v221, %v347
        %v349 = vpop.f32.mrf.mxu0
        %350 = vdwg.mxu0
        %351 = vmatpush.bf16.msra.mxu0 0
        %352 = vmatpush.bf16.msra.mxu0 0
        %353 = vmatpush.bf16.msra.mxu0 %v303
        %354 = vmatpush.bf16.msra.mxu0 %v300
        %355 = vmatpush.bf16.msra.mxu0 %v297
        %356 = vmatpush.bf16.msra.mxu0 %v294
        %357 = vmatpush.bf16.msra.mxu0 %v291
        %358 = vmatpush.bf16.msra.mxu0 %v288
        %359 = vmatmul.bf16.gmra.mxu0 %v323
        %v360 = vpop.f32.mrf.mxu0
        %v361 = vadd.f32 %v222, %v360
        %v362 = vpop.f32.mrf.mxu0
        %363 = vdwg.mxu0
        %364 = vst [vmem:[%s161] sm:$0xff] %v335
        %365 = vst [vmem:[%s161 + $0x8] sm:$0xff] %v348
        %366 = vst [vmem:[%s161 + $0x10] sm:$0xff] %v361
        %s367 = sand.u32 %s93, 1
        %s368 = scalar_lea.sflag [#allocation3], %s367
        %s369 = sand.u32 %s93, 1
        %s370 = smul.addr %s369, 24
        %s371 = scalar_lea.vmem [#allocation2], %s370
        // Predicated region
        $region33: #{layernorm_linear.1} parent=31 // pred_check
          %p372 = pneg %p103
        $region34: #{layernorm_linear.1} parent=31 // pred_check_branch
          %374 = sbr.rel (%p372) target = $region36
        $region35: #{layernorm_linear.1} parent=31 // pred_region
          %376 = vsyncadd %s368, 0
          %s377 = smul.addr %s17, 3
          %s378 = smul.addr %s377, 8
          %s379 = scalar_lea.hbm %s3, %s378
          %s381 = sshll.u32 %s371, 4
          %s382 = int_to_ptr.vmem [resolvable:$true] %s381
          %s383 = sshll.u32 %s379, 4
          %s384 = int_to_ptr.hbm [resolvable:$true] %s383
          %386 = dma.vmem_to_hbm [thread:$0]  %s382, 384, %s384, %s368
        $region36: #{layernorm_linear.1} parent=31 // pred_fallthru
          _
      $region32: #{layernorm_linear.1} parent=5 // pred_fallthru
        _
      %p387 = scmp.le.s32.totalorder 2, %s12
      // Predicated region
      $region37: #{layernorm_linear.1} parent=5 // pred_check
        %p388 = pneg %p387
      $region38: #{layernorm_linear.1} parent=5 // pred_check_branch
        %390 = sbr.rel (%p388) target = $region40
      $region39: #{layernorm_linear.1} parent=5 // pred_region
        %s391 = ssub.s32 %s12, 2
        // Predicated region
        $region41: #{layernorm_linear.1} parent=39 // pred_check
          %p392 = pneg %p109
        $region42: #{layernorm_linear.1} parent=39 // pred_check_branch
          %394 = sbr.rel (%p392) target = $region44
        $region43: #{layernorm_linear.1} parent=39 // pred_region
          %s395 = sand.u32 %s94, 1
          %s396 = scalar_lea.sflag [#allocation3], %s395
          %s397 = sand.u32 %s94, 1
          %s398 = smul.addr %s397, 24
          %s399 = scalar_lea.vmem [#allocation2], %s398
          %401 = dma.done %s396, 384
        $region44: #{layernorm_linear.1} parent=39 // pred_fallthru
          _
      $region40: #{layernorm_linear.1} parent=5 // pred_fallthru
        _
    $region6: #{layernorm_linear.1} parent=1 // loop_footer
      %s16 = sadd.s32 1, %s12
    $region7: #{layernorm_linear.1} parent=1 // loop_footer_branch
      %11 = sbr.rel target = $region3
    $region8: #{layernorm_linear.1} parent=1 // loop_exit
      _
    %402 = vsyncpa [#allocation3], 1
    %s403 = scalar_lea.sflag [#allocation3], 1
    %404 = vsyncpa %s403, 1

</llo_original>
